<compile_context>
chip_gen: v6e
topology: v6e:2x2x1
jax: 0.10.0
libtpu: 0.0.40
codegen_flags: <defaults>
</compile_context>

<pallas_src>
import functools

import jax
import jax.numpy as jnp
from jax import lax
from jax.experimental import pallas as pl
from jax.experimental.pallas import tpu as pltpu

HIDDEN = 512  # fixed by the module: Conv2d(32 << len(cfg), 512, 1, 1, 0)


def _round_up(x, m):
    return (x + m - 1) // m * m


def _vmem_capacity_bytes():
    """Physical per-core VMEM, with a conservative fallback (v7x-sized)."""
    try:
        cap = getattr(pltpu.get_tpu_info(), "vmem_capacity_bytes", None)
        if cap:
            return int(cap)
    except Exception:
        pass
    return 64 << 20


def _pick_tile_n(n):
    """Smallest batch tile in {8,16,32,64} with no extra padding; prefer >=2 batch tiles
    (v7x has 2 TensorCores). Batches smaller than 8 use the full batch as one block."""
    if n < 8:
        return max(n, 1)
    best = 8
    waste8 = _round_up(n, 8) - n
    for c in (16, 32, 64):
        n_pad = _round_up(n, c)
        if n_pad - n == waste8 and n_pad // c >= 2:
            best = c
    return best


def _head_kernel(x_ref, w1_ref, b1_ref, w2_ref, b2_ref, w3_ref, b3_ref,
                 out_ref, acc_ref, *, inv_hw, feat_pad, hw, tile_hw, mask_hw):
    # Grid = (batch tiles [parallel], spatial tiles [arbitrary / reduction]).
    s = pl.program_id(1)

    @pl.when(s == 0)
    def _init():
        acc_ref[...] = jnp.zeros_like(acc_ref)

    # AdaptiveAvgPool2d((1,1)): accumulate partial spatial sums.
    # x block is (tile_n, Cb, tile_hw) in native NCHW layout (lanes = spatial).
    x = x_ref[...].astype(jnp.float32)
    if mask_hw:  # static flag: ragged last spatial tile -> zero the out-of-range lanes
        pos = s * tile_hw + lax.broadcasted_iota(jnp.int32, (1, 1, tile_hw), 2)
        x = jnp.where(pos < hw, x, 0.0)
    acc_ref[...] += jnp.sum(x, axis=-1)          # (tile_n, Cb) f32, Cb on lanes

    @pl.when(s == pl.num_programs(1) - 1)
    def _finalize():
        pooled = acc_ref[...] * inv_hw           # (tile_n, Cb) f32

        # scatters: 1x1 conv (Cb -> 512) + Dropout(eval: identity) + ReLU
        h = jnp.dot(pooled.astype(jnp.bfloat16), w1_ref[...],
                    preferred_element_type=jnp.float32) + b1_ref[...]
        h = jnp.maximum(h, 0.0)

        # 1x1 conv (512 -> feat_num)
        scat = jnp.dot(h.astype(jnp.bfloat16), w2_ref[...],
                       preferred_element_type=jnp.float32) + b2_ref[...]

        # classifier: 1x1 conv (feat_num -> cls_num)
        cls = jnp.dot(scat.astype(jnp.bfloat16), w3_ref[...],
                      preferred_element_type=jnp.float32) + b3_ref[...]

        # Single lane-dense output slab: [ scat | cls ], both 128-lane aligned.
        out_ref[:, :feat_pad] = scat
        out_ref[:, feat_pad:] = cls


def mainnet_head(x_nchw, params):
    """x_nchw: (N, Cb, H, W) backbone features. Returns (scatters (N, feat), cls (N, cls))."""
    N, Cb, H, W = x_nchw.shape
    w1, b1, w2, b2, w3, b3 = params
    hidden = w1.shape[1]
    feat_num = w2.shape[1]
    cls_num = w3.shape[1]
    HW = H * W

    # Lane padding for the (tiny) weights / output slab only.
    feat_pad = _round_up(feat_num, 128)
    cls_pad = _round_up(cls_num, 128)
    out_pad = feat_pad + cls_pad

    # Free relayout: NCHW -> (N, Cb, H*W); no transpose / cast / pad of the big tensor.
    x = x_nchw.reshape(N, Cb, HW)
    x_itemsize = jnp.dtype(x.dtype).itemsize

    # ---- VMEM sizing (portable across v5e / v6e / v7x) ----
    vmem_cap = _vmem_capacity_bytes()
    scoped_cap = min(vmem_cap * 5 // 8, 64 << 20)      # 40 MiB on v7x, 64 MiB on v5e/v6e
    w_bytes = (Cb * hidden + hidden * feat_pad + feat_pad * cls_pad) * 2 \
              + (hidden + feat_pad + cls_pad) * 4
    # Per x buffer (double-buffered by the pipeline): ~scoped_cap/5 => ~8-13 MiB.
    budget = max(2 << 20, min(scoped_cap // 5, (scoped_cap - 4 * w_bytes) // 2))

    # ---- Tile selection ----
    tile_n = _pick_tile_n(N)
    min_hw_tile = HW if HW <= 128 else 128
    while tile_n > 8 and tile_n * Cb * min_hw_tile * x_itemsize > budget:
        tile_n //= 2

    if HW <= 128:
        tile_hw = HW                                   # full dim (no 128-divisibility needed)
    else:
        max_hw = max(128, (budget // (tile_n * Cb * x_itemsize)) // 128 * 128)
        tile_hw = min(HW // 128 * 128, max_hw)

    grid_b = pl.cdiv(N, tile_n)
    grid_s = pl.cdiv(HW, tile_hw)
    mask_hw = (HW % tile_hw) != 0                      # ragged last spatial tile -> mask in-kernel

    x_tile_bytes = tile_n * Cb * tile_hw * x_itemsize
    out_tile_bytes = tile_n * out_pad * 4
    acc_bytes = tile_n * Cb * 4
    est = 2 * x_tile_bytes + 2 * w_bytes + 2 * out_tile_bytes + acc_bytes + (2 << 20)
    vmem_limit = int(min(max(est, 24 << 20), vmem_cap * 9 // 10))

    # bf16 weights for the MXU (f32 accumulation inside the kernel); f32 biases.
    # PyTorch Conv2d weight (Cout, Cin, 1, 1) is stored transposed as (Cin, Cout).
    w1p = w1.astype(jnp.bfloat16)
    b1p = b1.reshape(1, hidden).astype(jnp.float32)
    w2p = jnp.pad(w2, ((0, 0), (0, feat_pad - feat_num))).astype(jnp.bfloat16)
    b2p = jnp.pad(b2.reshape(1, feat_num),
                  ((0, 0), (0, feat_pad - feat_num))).astype(jnp.float32)
    w3p = jnp.pad(w3, ((0, feat_pad - feat_num), (0, cls_pad - cls_num))).astype(jnp.bfloat16)
    b3p = jnp.pad(b3.reshape(1, cls_num),
                  ((0, 0), (0, cls_pad - cls_num))).astype(jnp.float32)

    kernel = functools.partial(_head_kernel, inv_hw=1.0 / float(HW), feat_pad=feat_pad,
                               hw=HW, tile_hw=tile_hw, mask_hw=mask_hw)

    out = pl.pallas_call(
        kernel,
        out_shape=jax.ShapeDtypeStruct((grid_b * tile_n, out_pad), jnp.float32),
        grid=(grid_b, grid_s),
        in_specs=[
            pl.BlockSpec((tile_n, Cb, tile_hw), lambda b, s: (b, 0, s)),
            # Weights/biases: constant block index -> fetched once, resident in VMEM.
            pl.BlockSpec((Cb, hidden), lambda b, s: (0, 0)),
            pl.BlockSpec((1, hidden), lambda b, s: (0, 0)),
            pl.BlockSpec((hidden, feat_pad), lambda b, s: (0, 0)),
            pl.BlockSpec((1, feat_pad), lambda b, s: (0, 0)),
            pl.BlockSpec((feat_pad, cls_pad), lambda b, s: (0, 0)),
            pl.BlockSpec((1, cls_pad), lambda b, s: (0, 0)),
        ],
        out_specs=pl.BlockSpec((tile_n, out_pad), lambda b, s: (b, 0)),
        scratch_shapes=[pltpu.VMEM((tile_n, Cb), jnp.float32)],
        compiler_params=pltpu.CompilerParams(
            dimension_semantics=("parallel", "arbitrary"),
            vmem_limit_bytes=vmem_limit,
        ),
    )(x, w1p, b1p, w2p, b2p, w3p, b3p)

    scat = out[:N, :feat_num]
    cls = out[:N, feat_pad:feat_pad + cls_num]
    return scat, cls


def init_params(key, c_backbone, hidden, feat_num, cls_num):
    """Deterministic kaiming-style (fan_in-scaled normal) init; zero biases (as in the module)."""
    k1, k2, k3 = jax.random.split(key, 3)
    w1 = jax.random.normal(k1, (c_backbone, hidden), jnp.float32) * (2.0 / c_backbone) ** 0.5
    b1 = jnp.zeros((1, hidden), jnp.float32)
    w2 = jax.random.normal(k2, (hidden, feat_num), jnp.float32) * (2.0 / hidden) ** 0.5
    b2 = jnp.zeros((1, feat_num), jnp.float32)
    w3 = jax.random.normal(k3, (feat_num, cls_num), jnp.float32) * (2.0 / feat_num) ** 0.5
    b3 = jnp.zeros((1, cls_num), jnp.float32)
    return (w1, b1, w2, b2, w3, b3)


def reference(x_nchw, params):
    """Pure-JAX reference of the same math (eval-mode head, bf16 weights, f32 accumulation)."""
    w1, b1, w2, b2, w3, b3 = params
    pooled = jnp.mean(x_nchw.astype(jnp.float32), axis=(2, 3))   # AdaptiveAvgPool2d((1,1)) + squeeze
    w1b, w2b, w3b = (w.astype(jnp.bfloat16) for w in (w1, w2, w3))
    h = jnp.dot(pooled.astype(jnp.bfloat16), w1b, preferred_element_type=jnp.float32) + b1
    h = jnp.maximum(h, 0.0)                                      # dropout = identity in eval
    scat = jnp.dot(h.astype(jnp.bfloat16), w2b, preferred_element_type=jnp.float32) + b2
    cls = jnp.dot(scat.astype(jnp.bfloat16), w3b, preferred_element_type=jnp.float32) + b3
    return scat, cls


def _check(x, params, feat_num, cls_num):
    N = x.shape[0]
    scat, cls = mainnet_head(x, params)
    scat, cls = jax.block_until_ready((scat, cls))
    scat_ref, cls_ref = reference(x, params)
    assert scat.shape == (N, feat_num) and cls.shape == (N, cls_num)
    assert jnp.allclose(scat, scat_ref, atol=2e-2, rtol=2e-2), \
        float(jnp.max(jnp.abs(scat - scat_ref)))
    assert jnp.allclose(cls, cls_ref, atol=2e-2, rtol=2e-2), \
        float(jnp.max(jnp.abs(cls - cls_ref)))


if __name__ == "__main__":
    # cfg=(1, 2) -> backbone output channels = 32 << len(cfg) = 128 (small, consistent setup)
    cfg_len = 2
    c_backbone = 32 << cfg_len   # 128
    feat_num = 64
    cls_num = 16

    key = jax.random.PRNGKey(0)
    kx1, kx2, kp = jax.random.split(key, 3)
    params = init_params(kp, c_backbone, HIDDEN, feat_num, cls_num)

    # Test 1: small, aligned spatial extent (single spatial tile, no masking).
    x1 = jax.random.normal(kx1, (2, c_backbone, 8, 8), jnp.float32)    # NCHW backbone features
    _check(x1, params, feat_num, cls_num)

    # Test 2: ragged shapes -- H*W=169 exercises the in-kernel spatial mask (two spatial
    # tiles of 128), N=10 exercises the partial batch edge block (tile_n=8, 2 batch tiles).
    x2 = jax.random.normal(kx2, (10, c_backbone, 13, 13), jnp.float32)
    _check(x2, params, feat_num, cls_num)

    print("KERNEL_OK")
</pallas_src>

<mosaic_0001>
module attributes {stable_mosaic.version = 11 : i64} {
  func.func @_head_kernel(%arg0: i32, %arg1: i32, %arg2: memref<2x128x64xf32, #tpu.memory_space<vmem>>, %arg3: memref<128x512xbf16, #tpu.memory_space<vmem>>, %arg4: memref<1x512xf32, #tpu.memory_space<vmem>>, %arg5: memref<512x128xbf16, #tpu.memory_space<vmem>>, %arg6: memref<1x128xf32, #tpu.memory_space<vmem>>, %arg7: memref<128x128xbf16, #tpu.memory_space<vmem>>, %arg8: memref<1x128xf32, #tpu.memory_space<vmem>>, %arg9: memref<2x256xf32, #tpu.memory_space<vmem>>, %arg10: memref<2x128xf32, #tpu.memory_space<vmem>>) attributes {dimension_semantics = [#tpu.dimension_semantics<parallel>, #tpu.dimension_semantics<arbitrary>], iteration_bounds = array<i64: 1, 1>, scalar_prefetch = 0 : i64, scratch_operands = 1 : i64, tpu.core_type = #tpu.core_type<tc>, window_params = [{transform_indices = @transform_0, window_bounds = array<i64: 2, 128, 64>}, {pipeline_mode = #tpu.pipeline_mode<synchronous>, transform_indices = @transform_1, window_bounds = array<i64: 128, 512>}, {pipeline_mode = #tpu.pipeline_mode<synchronous>, transform_indices = @transform_2, window_bounds = array<i64: 1, 512>}, {pipeline_mode = #tpu.pipeline_mode<synchronous>, transform_indices = @transform_3, window_bounds = array<i64: 512, 128>}, {pipeline_mode = #tpu.pipeline_mode<synchronous>, transform_indices = @transform_4, window_bounds = array<i64: 1, 128>}, {pipeline_mode = #tpu.pipeline_mode<synchronous>, transform_indices = @transform_5, window_bounds = array<i64: 128, 128>}, {pipeline_mode = #tpu.pipeline_mode<synchronous>, transform_indices = @transform_6, window_bounds = array<i64: 1, 128>}, {transform_indices = @transform_7, window_bounds = array<i64: 2, 256>}]} {
    %c0_i32 = arith.constant 0 : i32
    %0 = arith.cmpi eq, %arg1, %c0_i32 : i32
    %1 = arith.extui %0 : i1 to i32
    %c0_i32_0 = arith.constant 0 : i32
    %2 = arith.cmpi ne, %1, %c0_i32_0 : i32
    scf.if %2 {
      %cst_9 = arith.constant 0.000000e+00 : f32
      %11 = vector.broadcast %cst_9 : f32 to vector<2x128xf32>
      %c0_10 = arith.constant 0 : index
      %c0_11 = arith.constant 0 : index
      %12 = vector.load %arg10[%c0_10, %c0_11] : memref<2x128xf32, #tpu.memory_space<vmem>>, vector<2x128xf32>
      tpu.vector_store %arg10[%c0_10, %c0_11], %11 {strides = array<i32>} : memref<2x128xf32, #tpu.memory_space<vmem>>, vector<2x128xf32>,
    } else {
    }
    %c0 = arith.constant 0 : index
    %c0_1 = arith.constant 0 : index
    %c0_2 = arith.constant 0 : index
    %3 = vector.load %arg2[%c0, %c0_1, %c0_2] : memref<2x128x64xf32, #tpu.memory_space<vmem>>, vector<2x128x64xf32>
    %c0_3 = arith.constant 0 : index
    %c0_4 = arith.constant 0 : index
    %4 = vector.load %arg10[%c0_3, %c0_4] : memref<2x128xf32, #tpu.memory_space<vmem>>, vector<2x128xf32>
    %cst = arith.constant dense<0.000000e+00> : vector<2x128xf32>
    %5 = vector.multi_reduction <add>, %3, %cst [2] : vector<2x128x64xf32> to vector<2x128xf32>
    %6 = arith.addf %4, %5 : vector<2x128xf32>
    %c0_5 = arith.constant 0 : index
    %c0_6 = arith.constant 0 : index
    %7 = vector.load %arg10[%c0_5, %c0_6] : memref<2x128xf32, #tpu.memory_space<vmem>>, vector<2x128xf32>
    tpu.vector_store %arg10[%c0_5, %c0_6], %6 {strides = array<i32>} : memref<2x128xf32, #tpu.memory_space<vmem>>, vector<2x128xf32>,
    %c0_i32_7 = arith.constant 0 : i32
    %8 = arith.cmpi eq, %arg1, %c0_i32_7 : i32
    %9 = arith.extui %8 : i1 to i32
    %c0_i32_8 = arith.constant 0 : i32
    %10 = arith.cmpi ne, %9, %c0_i32_8 : i32
    scf.if %10 {
      %c0_9 = arith.constant 0 : index
      %c0_10 = arith.constant 0 : index
      %11 = vector.load %arg10[%c0_9, %c0_10] : memref<2x128xf32, #tpu.memory_space<vmem>>, vector<2x128xf32>
      %cst_11 = arith.constant 1.562500e-02 : f32
      %12 = vector.broadcast %cst_11 : f32 to vector<2x128xf32>
      %13 = arith.mulf %11, %12 : vector<2x128xf32>
      %14 = arith.truncf %13 : vector<2x128xf32> to vector<2x128xbf16>
      %c0_12 = arith.constant 0 : index
      %c0_13 = arith.constant 0 : index
      %15 = vector.load %arg3[%c0_12, %c0_13] : memref<128x512xbf16, #tpu.memory_space<vmem>>, vector<128x512xbf16>
      %cst_14 = arith.constant dense<0.000000e+00> : vector<2x512xf32>
      %16 = tpu.matmul %14, %15, %cst_14 {dimension_numbers = #tpu.dot_dimension_numbers<[1], [0], [0], [1], [0, 0, 1, 1], [], []>} : vector<2x128xbf16>, vector<128x512xbf16>, vector<2x512xf32> -> vector<2x512xf32>
      %c0_15 = arith.constant 0 : index
      %c0_16 = arith.constant 0 : index
      %17 = vector.load %arg4[%c0_15, %c0_16] : memref<1x512xf32, #tpu.memory_space<vmem>>, vector<1x512xf32>
      %18 = vector.broadcast %17 : vector<1x512xf32> to vector<2x512xf32>
      %19 = arith.addf %16, %18 : vector<2x512xf32>
      %cst_17 = arith.constant 0.000000e+00 : f32
      %20 = vector.broadcast %cst_17 : f32 to vector<2x512xf32>
      %21 = arith.maximumf %19, %20 : vector<2x512xf32>
      %22 = arith.truncf %21 : vector<2x512xf32> to vector<2x512xbf16>
      %c0_18 = arith.constant 0 : index
      %c0_19 = arith.constant 0 : index
      %23 = vector.load %arg5[%c0_18, %c0_19] : memref<512x128xbf16, #tpu.memory_space<vmem>>, vector<512x128xbf16>
      %cst_20 = arith.constant dense<0.000000e+00> : vector<2x128xf32>
      %24 = tpu.matmul %22, %23, %cst_20 {dimension_numbers = #tpu.dot_dimension_numbers<[1], [0], [0], [1], [0, 0, 1, 1], [], []>} : vector<2x512xbf16>, vector<512x128xbf16>, vector<2x128xf32> -> vector<2x128xf32>
      %c0_21 = arith.constant 0 : index
      %c0_22 = arith.constant 0 : index
      %25 = vector.load %arg6[%c0_21, %c0_22] : memref<1x128xf32, #tpu.memory_space<vmem>>, vector<1x128xf32>
      %26 = vector.broadcast %25 : vector<1x128xf32> to vector<2x128xf32>
      %27 = arith.addf %24, %26 : vector<2x128xf32>
      %28 = arith.truncf %27 : vector<2x128xf32> to vector<2x128xbf16>
      %c0_23 = arith.constant 0 : index
      %c0_24 = arith.constant 0 : index
      %29 = vector.load %arg7[%c0_23, %c0_24] : memref<128x128xbf16, #tpu.memory_space<vmem>>, vector<128x128xbf16>
      %cst_25 = arith.constant dense<0.000000e+00> : vector<2x128xf32>
      %30 = tpu.matmul %28, %29, %cst_25 {dimension_numbers = #tpu.dot_dimension_numbers<[1], [0], [0], [1], [0, 0, 1, 1], [], []>} : vector<2x128xbf16>, vector<128x128xbf16>, vector<2x128xf32> -> vector<2x128xf32>
      %c0_26 = arith.constant 0 : index
      %c0_27 = arith.constant 0 : index
      %31 = vector.load %arg8[%c0_26, %c0_27] : memref<1x128xf32, #tpu.memory_space<vmem>>, vector<1x128xf32>
      %32 = vector.broadcast %31 : vector<1x128xf32> to vector<2x128xf32>
      %33 = arith.addf %30, %32 : vector<2x128xf32>
      %c0_28 = arith.constant 0 : index
      %c0_29 = arith.constant 0 : index
      %34 = vector.load %arg9[%c0_28, %c0_29] : memref<2x256xf32, #tpu.memory_space<vmem>>, vector<2x128xf32>
      tpu.vector_store %arg9[%c0_28, %c0_29], %27 {strides = array<i32>} : memref<2x256xf32, #tpu.memory_space<vmem>>, vector<2x128xf32>,
      %c0_30 = arith.constant 0 : index
      %c128 = arith.constant 128 : index
      %35 = vector.load %arg9[%c0_30, %c128] : memref<2x256xf32, #tpu.memory_space<vmem>>, vector<2x128xf32>
      tpu.vector_store %arg9[%c0_30, %c128], %33 {strides = array<i32>} : memref<2x256xf32, #tpu.memory_space<vmem>>, vector<2x128xf32>,
    } else {
    }
    return
  }
  func.func @transform_0(%arg0: i32, %arg1: i32) -> (i32, i32, i32) {
    %c0_i32 = arith.constant 0 : i32
    %c0_i32_0 = arith.constant 0 : i32
    return %arg0, %c0_i32, %arg1 : i32, i32, i32
  }
  func.func @transform_1(%arg0: i32, %arg1: i32) -> (i32, i32) {
    %c0_i32 = arith.constant 0 : i32
    %c0_i32_0 = arith.constant 0 : i32
    %c0_i32_1 = arith.constant 0 : i32
    return %c0_i32, %c0_i32_0 : i32, i32
  }
  func.func @transform_2(%arg0: i32, %arg1: i32) -> (i32, i32) {
    %c0_i32 = arith.constant 0 : i32
    %c0_i32_0 = arith.constant 0 : i32
    %c0_i32_1 = arith.constant 0 : i32
    return %c0_i32, %c0_i32_0 : i32, i32
  }
  func.func @transform_3(%arg0: i32, %arg1: i32) -> (i32, i32) {
    %c0_i32 = arith.constant 0 : i32
    %c0_i32_0 = arith.constant 0 : i32
    %c0_i32_1 = arith.constant 0 : i32
    return %c0_i32, %c0_i32_0 : i32, i32
  }
  func.func @transform_4(%arg0: i32, %arg1: i32) -> (i32, i32) {
    %c0_i32 = arith.constant 0 : i32
    %c0_i32_0 = arith.constant 0 : i32
    %c0_i32_1 = arith.constant 0 : i32
    return %c0_i32, %c0_i32_0 : i32, i32
  }
  func.func @transform_5(%arg0: i32, %arg1: i32) -> (i32, i32) {
    %c0_i32 = arith.constant 0 : i32
    %c0_i32_0 = arith.constant 0 : i32
    %c0_i32_1 = arith.constant 0 : i32
    return %c0_i32, %c0_i32_0 : i32, i32
  }
  func.func @transform_6(%arg0: i32, %arg1: i32) -> (i32, i32) {
    %c0_i32 = arith.constant 0 : i32
    %c0_i32_0 = arith.constant 0 : i32
    %c0_i32_1 = arith.constant 0 : i32
    return %c0_i32, %c0_i32_0 : i32, i32
  }
  func.func @transform_7(%arg0: i32, %arg1: i32) -> (i32, i32) {
    %c0_i32 = arith.constant 0 : i32
    %c0_i32_0 = arith.constant 0 : i32
    return %arg0, %c0_i32 : i32, i32
  }
}

</mosaic_0001>

<llo_original>
// kernel: tpu_custom_call.1
$region0: #{tpu_custom_call.1}
  #allocation0 [shape = 'u32[]', space=smem, size = 0x4, offset = 0x4, fixed_abs, tag = 'smem constant byte address 0x4 - core index']
  #allocation1 [shape = 'u32[144,128]{1,0:T(1,128)}', space=vmem, size = 0x12000, scoped, tag = 'internal scratch']
  #allocation2 [shape = 'f32[2,128]{1,0:T(2,128)}', space=vmem, size = 0x400, scoped, tag = 'scratch operand']
  %s0 = inlined_call_operand.vmem [shape: f32[2,128,64], index: 0, kind: input, shape index: {}]
  %s1 = inlined_call_operand.vmem [shape: bf16[128,512], index: 1, kind: input, shape index: {}]
  %s2 = inlined_call_operand.vmem [shape: f32[1,512], index: 2, kind: input, shape index: {}]
  %s3 = inlined_call_operand.hbm [shape: bf16[512,128], index: 3, kind: input, shape index: {}]
  %s4 = inlined_call_operand.vmem [shape: f32[1,128], index: 4, kind: input, shape index: {}]
  %s5 = inlined_call_operand.vmem [shape: bf16[128,128], index: 5, kind: input, shape index: {}]
  %s6 = inlined_call_operand.vmem [shape: f32[1,128], index: 6, kind: input, shape index: {}]
  %s7 = inlined_call_operand.hbm [shape: f32[2,256], index: 7, kind: output, shape index: {}]
  %s8 = sld [smem:[#allocation0]]
  $region50: #{tpu_custom_call.1} parent=0
    _
  %s10 = ssub.s32 1, %s8
  %s11 = scalar_select 0, %s10, %s8
  $region1: #{tpu_custom_call.1} parent=0
    #allocation3 [shape = 'u8[131072]{0}', space=vmem, size = 0x20000, scoped, tag = 'input window, operand 3, single buffered']
    #allocation4 [shape = 's32[1]{0}', space=sflag, size = 0x4, scoped, tag = 'scoped memory for tpu_custom_call.1']
    #allocation5 [shape = 's32[1]{0}', space=sflag, size = 0x4, scoped, tag = 'scoped memory for tpu_custom_call.1']
    #allocation6 [shape = 'u8[2048]{0}', space=vmem, size = 0x800, scoped, tag = 'output window, operand 0, single buffered']
    %12 = vsyncpa [#allocation4], 0
    %13 = vsyncpa [#allocation5], 0
    // Predicated region
    $region2: #{tpu_custom_call.1} parent=1 // pred_check
      _
    $region3: #{tpu_custom_call.1} parent=1 // pred_check_branch
      %15 = sbr.rel (0) target = $region5
    $region4: #{tpu_custom_call.1} parent=1 // pred_region
      _
    $region5: #{tpu_custom_call.1} parent=1 // pred_fallthru
      _
    // Predicated region
    $region6: #{tpu_custom_call.1} parent=1 // pred_check
      _
    $region7: #{tpu_custom_call.1} parent=1 // pred_check_branch
      %17 = sbr.rel (0) target = $region9
    $region8: #{tpu_custom_call.1} parent=1 // pred_region
      _
    $region9: #{tpu_custom_call.1} parent=1 // pred_fallthru
      _
    // Predicated region
    $region10: #{tpu_custom_call.1} parent=1 // pred_check
      _
    $region11: #{tpu_custom_call.1} parent=1 // pred_check_branch
      %19 = sbr.rel (0) target = $region13
    $region12: #{tpu_custom_call.1} parent=1 // pred_region
      _
    $region13: #{tpu_custom_call.1} parent=1 // pred_fallthru
      _
    // Predicated region
    $region14: #{tpu_custom_call.1} parent=1 // pred_check
      _
    $region15: #{tpu_custom_call.1} parent=1 // pred_check_branch
      %21 = sbr.rel (0) target = $region17
    $region16: #{tpu_custom_call.1} parent=1 // pred_region
      %s23 = ssub.s32 4096, 4096
      %24 = vsyncadd [#allocation4], %s23
      %s25 = sshll.u32 [#allocation3], 4
      %s26 = int_to_ptr.vmem [resolvable:$true] %s25
      %31 = dma.hbm_to_vmem [thread:$0]  %s3, 4096, %s26, [#allocation4], 64, 64, 4
    $region17: #{tpu_custom_call.1} parent=1 // pred_fallthru
      _
    // Predicated region
    $region18: #{tpu_custom_call.1} parent=1 // pred_check
      _
    $region19: #{tpu_custom_call.1} parent=1 // pred_check_branch
      %33 = sbr.rel (0) target = $region21
    $region20: #{tpu_custom_call.1} parent=1 // pred_region
      _
    $region21: #{tpu_custom_call.1} parent=1 // pred_fallthru
      _
    // Predicated region
    $region22: #{tpu_custom_call.1} parent=1 // pred_check
      _
    $region23: #{tpu_custom_call.1} parent=1 // pred_check_branch
      %35 = sbr.rel (0) target = $region25
    $region24: #{tpu_custom_call.1} parent=1 // pred_region
      _
    $region25: #{tpu_custom_call.1} parent=1 // pred_fallthru
      _
    // Predicated region
    $region26: #{tpu_custom_call.1} parent=1 // pred_check
      _
    $region27: #{tpu_custom_call.1} parent=1 // pred_check_branch
      %37 = sbr.rel (0) target = $region29
    $region28: #{tpu_custom_call.1} parent=1 // pred_region
      _
    $region29: #{tpu_custom_call.1} parent=1 // pred_fallthru
      _
    // Predicated region
    $region30: #{tpu_custom_call.1} parent=1 // pred_check
      _
    $region31: #{tpu_custom_call.1} parent=1 // pred_check_branch
      %39 = sbr.rel (0) target = $region33
    $region32: #{tpu_custom_call.1} parent=1 // pred_region
      %40 = dma.done [#allocation4], 4096
    $region33: #{tpu_custom_call.1} parent=1 // pred_fallthru
      _
    %p42 = scmp.eq.s32.totalorder 0, 0
    // Predicated region
    $region34: #{tpu_custom_call.1} parent=1 // pred_check
      %p43 = pneg %p42
    $region35: #{tpu_custom_call.1} parent=1 // pred_check_branch
      %45 = sbr.rel (%p43) target = $region37
    $region36: #{tpu_custom_call.1} parent=1 // pred_region
      %46 = vst [vmem:[#allocation2] sm:$0x3] 0.0
    $region37: #{tpu_custom_call.1} parent=1 // pred_fallthru
      _
    %v47 = vld [vmem:[%s0] sm:$0xff]
    %v48 = vld [vmem:[%s0 + $0x8] sm:$0xff]
    %v49 = vld [vmem:[%s0 + $0x10] sm:$0xff]
    %v50 = vld [vmem:[%s0 + $0x18] sm:$0xff]
    %v51 = vld [vmem:[%s0 + $0x20] sm:$0xff]
    %v52 = vld [vmem:[%s0 + $0x28] sm:$0xff]
    %v53 = vld [vmem:[%s0 + $0x30] sm:$0xff]
    %v54 = vld [vmem:[%s0 + $0x38] sm:$0xff]
    %v55 = vld [vmem:[%s0 + $0x40] sm:$0xff]
    %v56 = vld [vmem:[%s0 + $0x48] sm:$0xff]
    %v57 = vld [vmem:[%s0 + $0x50] sm:$0xff]
    %v58 = vld [vmem:[%s0 + $0x58] sm:$0xff]
    %v59 = vld [vmem:[%s0 + $0x60] sm:$0xff]
    %v60 = vld [vmem:[%s0 + $0x68] sm:$0xff]
    %v61 = vld [vmem:[%s0 + $0x70] sm:$0xff]
    %v62 = vld [vmem:[%s0 + $0x78] sm:$0xff]
    %v63 = vld [vmem:[%s0 + $0x80] sm:$0xff]
    %v64 = vld [vmem:[%s0 + $0x88] sm:$0xff]
    %v65 = vld [vmem:[%s0 + $0x90] sm:$0xff]
    %v66 = vld [vmem:[%s0 + $0x98] sm:$0xff]
    %v67 = vld [vmem:[%s0 + $0xa0] sm:$0xff]
    %v68 = vld [vmem:[%s0 + $0xa8] sm:$0xff]
    %v69 = vld [vmem:[%s0 + $0xb0] sm:$0xff]
    %v70 = vld [vmem:[%s0 + $0xb8] sm:$0xff]
    %v71 = vld [vmem:[%s0 + $0xc0] sm:$0xff]
    %v72 = vld [vmem:[%s0 + $0xc8] sm:$0xff]
    %v73 = vld [vmem:[%s0 + $0xd0] sm:$0xff]
    %v74 = vld [vmem:[%s0 + $0xd8] sm:$0xff]
    %v75 = vld [vmem:[%s0 + $0xe0] sm:$0xff]
    %v76 = vld [vmem:[%s0 + $0xe8] sm:$0xff]
    %v77 = vld [vmem:[%s0 + $0xf0] sm:$0xff]
    %v78 = vld [vmem:[%s0 + $0xf8] sm:$0xff]
    %v79 = vld [vmem:[#allocation2] sm:$0x3]
    %vm80 = vcmask 523264
    %v81 = vsel %vm80, %v47, 0.0
    %82 = vadd.xlane.f32.xlu0 %v81
    %v83 = vpop.xlane.xlu0 %82
    %v84 = vsel %vm80, %v48, 0.0
    %85 = vadd.xlane.f32.xlu0 %v84
    %v86 = vpop.xlane.xlu0 %85
    %v87 = vsel %vm80, %v49, 0.0
    %88 = vadd.xlane.f32.xlu0 %v87
    %v89 = vpop.xlane.xlu0 %88
    %v90 = vsel %vm80, %v50, 0.0
    %91 = vadd.xlane.f32.xlu0 %v90
    %v92 = vpop.xlane.xlu0 %91
    %v93 = vsel %vm80, %v51, 0.0
    %94 = vadd.xlane.f32.xlu0 %v93
    %v95 = vpop.xlane.xlu0 %94
    %v96 = vsel %vm80, %v52, 0.0
    %97 = vadd.xlane.f32.xlu0 %v96
    %v98 = vpop.xlane.xlu0 %97
    %v99 = vsel %vm80, %v53, 0.0
    %100 = vadd.xlane.f32.xlu0 %v99
    %v101 = vpop.xlane.xlu0 %100
    %v102 = vsel %vm80, %v54, 0.0
    %103 = vadd.xlane.f32.xlu0 %v102
    %v104 = vpop.xlane.xlu0 %103
    %v105 = vsel %vm80, %v55, 0.0
    %106 = vadd.xlane.f32.xlu0 %v105
    %v107 = vpop.xlane.xlu0 %106
    %v108 = vsel %vm80, %v56, 0.0
    %109 = vadd.xlane.f32.xlu0 %v108
    %v110 = vpop.xlane.xlu0 %109
    %v111 = vsel %vm80, %v57, 0.0
    %112 = vadd.xlane.f32.xlu0 %v111
    %v113 = vpop.xlane.xlu0 %112
    %v114 = vsel %vm80, %v58, 0.0
    %115 = vadd.xlane.f32.xlu0 %v114
    %v116 = vpop.xlane.xlu0 %115
    %v117 = vsel %vm80, %v59, 0.0
    %118 = vadd.xlane.f32.xlu0 %v117
    %v119 = vpop.xlane.xlu0 %118
    %v120 = vsel %vm80, %v60, 0.0
    %121 = vadd.xlane.f32.xlu0 %v120
    %v122 = vpop.xlane.xlu0 %121
    %v123 = vsel %vm80, %v61, 0.0
    %124 = vadd.xlane.f32.xlu0 %v123
    %v125 = vpop.xlane.xlu0 %124
    %v126 = vsel %vm80, %v62, 0.0
    %127 = vadd.xlane.f32.xlu0 %v126
    %v128 = vpop.xlane.xlu0 %127
    %v129 = vsel %vm80, %v63, 0.0
    %130 = vadd.xlane.f32.xlu0 %v129
    %v131 = vpop.xlane.xlu0 %130
    %v132 = vsel %vm80, %v64, 0.0
    %133 = vadd.xlane.f32.xlu0 %v132
    %v134 = vpop.xlane.xlu0 %133
    %v135 = vsel %vm80, %v65, 0.0
    %136 = vadd.xlane.f32.xlu0 %v135
    %v137 = vpop.xlane.xlu0 %136
    %v138 = vsel %vm80, %v66, 0.0
    %139 = vadd.xlane.f32.xlu0 %v138
    %v140 = vpop.xlane.xlu0 %139
    %v141 = vsel %vm80, %v67, 0.0
    %142 = vadd.xlane.f32.xlu0 %v141
    %v143 = vpop.xlane.xlu0 %142
    %v144 = vsel %vm80, %v68, 0.0
    %145 = vadd.xlane.f32.xlu0 %v144
    %v146 = vpop.xlane.xlu0 %145
    %v147 = vsel %vm80, %v69, 0.0
    %148 = vadd.xlane.f32.xlu0 %v147
    %v149 = vpop.xlane.xlu0 %148
    %v150 = vsel %vm80, %v70, 0.0
    %151 = vadd.xlane.f32.xlu0 %v150
    %v152 = vpop.xlane.xlu0 %151
    %v153 = vsel %vm80, %v71, 0.0
    %154 = vadd.xlane.f32.xlu0 %v153
    %v155 = vpop.xlane.xlu0 %154
    %v156 = vsel %vm80, %v72, 0.0
    %157 = vadd.xlane.f32.xlu0 %v156
    %v158 = vpop.xlane.xlu0 %157
    %v159 = vsel %vm80, %v73, 0.0
    %160 = vadd.xlane.f32.xlu0 %v159
    %v161 = vpop.xlane.xlu0 %160
    %v162 = vsel %vm80, %v74, 0.0
    %163 = vadd.xlane.f32.xlu0 %v162
    %v164 = vpop.xlane.xlu0 %163
    %v165 = vsel %vm80, %v75, 0.0
    %166 = vadd.xlane.f32.xlu0 %v165
    %v167 = vpop.xlane.xlu0 %166
    %v168 = vsel %vm80, %v76, 0.0
    %169 = vadd.xlane.f32.xlu0 %v168
    %v170 = vpop.xlane.xlu0 %169
    %v171 = vsel %vm80, %v77, 0.0
    %172 = vadd.xlane.f32.xlu0 %v171
    %v173 = vpop.xlane.xlu0 %172
    %v174 = vsel %vm80, %v78, 0.0
    %175 = vadd.xlane.f32.xlu0 %v174
    %v176 = vpop.xlane.xlu0 %175
    %v209 = vlaneseq
    %v210 = vand.u32 %v209, 127
    %v211 = vlaneseq
    %v212 = vshrl.u32 %v211, 7
    %v213 = vsub.s32 %v210, %v212
    %v214 = vrot.slane %v83, %v213
    %v215 = vadd.s32 %v210, 4294967288
    %v216 = vlaneseq
    %v217 = vshrl.u32 %v216, 7
    %v218 = vsub.s32 %v215, %v217
    %v219 = vrot.slane %v86, %v218
    %vm220 = vcmask 130112
    %v221 = vsel %vm220, %v219, %v214
    %v222 = vadd.s32 %v210, 4294967280
    %v223 = vlaneseq
    %v224 = vshrl.u32 %v223, 7
    %v225 = vsub.s32 %v222, %v224
    %v226 = vrot.slane %v89, %v225
    %vm227 = vcmask 195712
    %v228 = vsel %vm227, %v226, %v221
    %v229 = vadd.s32 %v210, 4294967272
    %v230 = vlaneseq
    %v231 = vshrl.u32 %v230, 7
    %v232 = vsub.s32 %v229, %v231
    %v233 = vrot.slane %v92, %v232
    %vm234 = vcmask 261312
    %v235 = vsel %vm234, %v233, %v228
    %v236 = vadd.s32 %v210, 4294967264
    %v237 = vlaneseq
    %v238 = vshrl.u32 %v237, 7
    %v239 = vsub.s32 %v236, %v238
    %v240 = vrot.slane %v95, %v239
    %vm241 = vcmask 326912
    %v242 = vsel %vm241, %v240, %v235
    %v243 = vadd.s32 %v210, 4294967256
    %v244 = vlaneseq
    %v245 = vshrl.u32 %v244, 7
    %v246 = vsub.s32 %v243, %v245
    %v247 = vrot.slane %v98, %v246
    %vm248 = vcmask 392512
    %v249 = vsel %vm248, %v247, %v242
    %v250 = vadd.s32 %v210, 4294967248
    %v251 = vlaneseq
    %v252 = vshrl.u32 %v251, 7
    %v253 = vsub.s32 %v250, %v252
    %v254 = vrot.slane %v101, %v253
    %vm255 = vcmask 458112
    %v256 = vsel %vm255, %v254, %v249
    %v257 = vadd.s32 %v210, 4294967240
    %v258 = vlaneseq
    %v259 = vshrl.u32 %v258, 7
    %v260 = vsub.s32 %v257, %v259
    %v261 = vrot.slane %v104, %v260
    %vm262 = vcmask 523712
    %v263 = vsel %vm262, %v261, %v256
    %v264 = vadd.s32 %v210, 4294967232
    %v265 = vlaneseq
    %v266 = vshrl.u32 %v265, 7
    %v267 = vsub.s32 %v264, %v266
    %v268 = vrot.slane %v107, %v267
    %vm269 = vcmask 589312
    %v270 = vsel %vm269, %v268, %v263
    %v271 = vadd.s32 %v210, 4294967224
    %v272 = vlaneseq
    %v273 = vshrl.u32 %v272, 7
    %v274 = vsub.s32 %v271, %v273
    %v275 = vrot.slane %v110, %v274
    %vm276 = vcmask 654912
    %v277 = vsel %vm276, %v275, %v270
    %v278 = vadd.s32 %v210, 4294967216
    %v279 = vlaneseq
    %v280 = vshrl.u32 %v279, 7
    %v281 = vsub.s32 %v278, %v280
    %v282 = vrot.slane %v113, %v281
    %vm283 = vcmask 720512
    %v284 = vsel %vm283, %v282, %v277
    %v285 = vadd.s32 %v210, 4294967208
    %v286 = vlaneseq
    %v287 = vshrl.u32 %v286, 7
    %v288 = vsub.s32 %v285, %v287
    %v289 = vrot.slane %v116, %v288
    %vm290 = vcmask 786112
    %v291 = vsel %vm290, %v289, %v284
    %v292 = vadd.s32 %v210, 4294967200
    %v293 = vlaneseq
    %v294 = vshrl.u32 %v293, 7
    %v295 = vsub.s32 %v292, %v294
    %v296 = vrot.slane %v119, %v295
    %vm297 = vcmask 851712
    %v298 = vsel %vm297, %v296, %v291
    %v299 = vadd.s32 %v210, 4294967192
    %v300 = vlaneseq
    %v301 = vshrl.u32 %v300, 7
    %v302 = vsub.s32 %v299, %v301
    %v303 = vrot.slane %v122, %v302
    %vm304 = vcmask 917312
    %v305 = vsel %vm304, %v303, %v298
    %v306 = vadd.s32 %v210, 4294967184
    %v307 = vlaneseq
    %v308 = vshrl.u32 %v307, 7
    %v309 = vsub.s32 %v306, %v308
    %v310 = vrot.slane %v125, %v309
    %vm311 = vcmask 982912
    %v312 = vsel %vm311, %v310, %v305
    %v313 = vadd.s32 %v210, 4294967176
    %v314 = vlaneseq
    %v315 = vshrl.u32 %v314, 7
    %v316 = vsub.s32 %v313, %v315
    %v317 = vrot.slane %v128, %v316
    %vm318 = vcmask 1048512
    %v319 = vsel %vm318, %v317, %v312
    %v320 = vlaneseq
    %v321 = vshrl.u32 %v320, 7
    %v322 = vsub.s32 %v210, %v321
    %v323 = vrot.slane %v131, %v322
    %v324 = vlaneseq
    %v325 = vshrl.u32 %v324, 7
    %v326 = vsub.s32 %v215, %v325
    %v327 = vrot.slane %v134, %v326
    %v328 = vsel %vm220, %v327, %v323
    %v329 = vlaneseq
    %v330 = vshrl.u32 %v329, 7
    %v331 = vsub.s32 %v222, %v330
    %v332 = vrot.slane %v137, %v331
    %v333 = vsel %vm227, %v332, %v328
    %v334 = vlaneseq
    %v335 = vshrl.u32 %v334, 7
    %v336 = vsub.s32 %v229, %v335
    %v337 = vrot.slane %v140, %v336
    %v338 = vsel %vm234, %v337, %v333
    %v339 = vlaneseq
    %v340 = vshrl.u32 %v339, 7
    %v341 = vsub.s32 %v236, %v340
    %v342 = vrot.slane %v143, %v341
    %v343 = vsel %vm241, %v342, %v338
    %v344 = vlaneseq
    %v345 = vshrl.u32 %v344, 7
    %v346 = vsub.s32 %v243, %v345
    %v347 = vrot.slane %v146, %v346
    %v348 = vsel %vm248, %v347, %v343
    %v349 = vlaneseq
    %v350 = vshrl.u32 %v349, 7
    %v351 = vsub.s32 %v250, %v350
    %v352 = vrot.slane %v149, %v351
    %v353 = vsel %vm255, %v352, %v348
    %v354 = vlaneseq
    %v355 = vshrl.u32 %v354, 7
    %v356 = vsub.s32 %v257, %v355
    %v357 = vrot.slane %v152, %v356
    %v358 = vsel %vm262, %v357, %v353
    %v359 = vlaneseq
    %v360 = vshrl.u32 %v359, 7
    %v361 = vsub.s32 %v264, %v360
    %v362 = vrot.slane %v155, %v361
    %v363 = vsel %vm269, %v362, %v358
    %v364 = vlaneseq
    %v365 = vshrl.u32 %v364, 7
    %v366 = vsub.s32 %v271, %v365
    %v367 = vrot.slane %v158, %v366
    %v368 = vsel %vm276, %v367, %v363
    %v369 = vlaneseq
    %v370 = vshrl.u32 %v369, 7
    %v371 = vsub.s32 %v278, %v370
    %v372 = vrot.slane %v161, %v371
    %v373 = vsel %vm283, %v372, %v368
    %v374 = vlaneseq
    %v375 = vshrl.u32 %v374, 7
    %v376 = vsub.s32 %v285, %v375
    %v377 = vrot.slane %v164, %v376
    %v378 = vsel %vm290, %v377, %v373
    %v379 = vlaneseq
    %v380 = vshrl.u32 %v379, 7
    %v381 = vsub.s32 %v292, %v380
    %v382 = vrot.slane %v167, %v381
    %v383 = vsel %vm297, %v382, %v378
    %v384 = vlaneseq
    %v385 = vshrl.u32 %v384, 7
    %v386 = vsub.s32 %v299, %v385
    %v387 = vrot.slane %v170, %v386
    %v388 = vsel %vm304, %v387, %v383
    %v389 = vlaneseq
    %v390 = vshrl.u32 %v389, 7
    %v391 = vsub.s32 %v306, %v390
    %v392 = vrot.slane %v173, %v391
    %v393 = vsel %vm311, %v392, %v388
    %v394 = vlaneseq
    %v395 = vshrl.u32 %v394, 7
    %v396 = vsub.s32 %v313, %v395
    %v397 = vrot.slane %v176, %v396
    %v398 = vsel %vm318, %v397, %v393
    %vm399 = vcmask 1041409
    %v400 = vsel %vm399, %v398, %v319
    %v402 = vadd.f32 %v79, %v400
    %403 = vst [vmem:[#allocation2] sm:$0x3] %v402
    // Predicated region
    $region38: #{tpu_custom_call.1} parent=1 // pred_check
      %p404 = pneg %p42
    $region39: #{tpu_custom_call.1} parent=1 // pred_check_branch
      %406 = sbr.rel (%p404) target = $region41
    $region40: #{tpu_custom_call.1} parent=1 // pred_region
      %v407 = vld [vmem:[#allocation2] sm:$0x3]
      %v408 = vmul.f32 %v407, 0.015625
      %v409 = vpack.c.bf16 %v408, %v408
      %v410 = vld [vmem:[%s1] sm:$0xff]
      %v411 = vld [vmem:[%s1 + $0x8] sm:$0xff]
      %v412 = vld [vmem:[%s1 + $0x10] sm:$0xff]
      %v413 = vld [vmem:[%s1 + $0x18] sm:$0xff]
      %v414 = vld [vmem:[%s1 + $0x20] sm:$0xff]
      %v415 = vld [vmem:[%s1 + $0x28] sm:$0xff]
      %v416 = vld [vmem:[%s1 + $0x30] sm:$0xff]
      %v417 = vld [vmem:[%s1 + $0x38] sm:$0xff]
      %v418 = vld [vmem:[%s1 + $0x40] sm:$0xff]
      %v419 = vld [vmem:[%s1 + $0x48] sm:$0xff]
      %v420 = vld [vmem:[%s1 + $0x50] sm:$0xff]
      %v421 = vld [vmem:[%s1 + $0x58] sm:$0xff]
      %v422 = vld [vmem:[%s1 + $0x60] sm:$0xff]
      %v423 = vld [vmem:[%s1 + $0x68] sm:$0xff]
      %v424 = vld [vmem:[%s1 + $0x70] sm:$0xff]
      %v425 = vld [vmem:[%s1 + $0x78] sm:$0xff]
      %v426 = vld [vmem:[%s1 + $0x80] sm:$0xff]
      %v427 = vld [vmem:[%s1 + $0x88] sm:$0xff]
      %v428 = vld [vmem:[%s1 + $0x90] sm:$0xff]
      %v429 = vld [vmem:[%s1 + $0x98] sm:$0xff]
      %v430 = vld [vmem:[%s1 + $0xa0] sm:$0xff]
      %v431 = vld [vmem:[%s1 + $0xa8] sm:$0xff]
      %v432 = vld [vmem:[%s1 + $0xb0] sm:$0xff]
      %v433 = vld [vmem:[%s1 + $0xb8] sm:$0xff]
      %v434 = vld [vmem:[%s1 + $0xc0] sm:$0xff]
      %v435 = vld [vmem:[%s1 + $0xc8] sm:$0xff]
      %v436 = vld [vmem:[%s1 + $0xd0] sm:$0xff]
      %v437 = vld [vmem:[%s1 + $0xd8] sm:$0xff]
      %v438 = vld [vmem:[%s1 + $0xe0] sm:$0xff]
      %v439 = vld [vmem:[%s1 + $0xe8] sm:$0xff]
      %v440 = vld [vmem:[%s1 + $0xf0] sm:$0xff]
      %v441 = vld [vmem:[%s1 + $0xf8] sm:$0xff]
      %v442 = vld [vmem:[%s2] sm:$0xf]
      %v444 = vlaneseq
      %v445 = vshrl.u32 %v444, 7
      %v446 = vsub.s32 0, %v445
      %v447 = vrot.slane %v442, %v446
      %v448 = vlaneseq
      %v449 = vshrl.u32 %v448, 7
      %v450 = vsub.s32 1, %v449
      %v451 = vrot.slane %v442, %v450
      %v452 = vlaneseq
      %v453 = vshrl.u32 %v452, 7
      %v454 = vsub.s32 2, %v453
      %v455 = vrot.slane %v442, %v454
      %v456 = vlaneseq
      %v457 = vshrl.u32 %v456, 7
      %v458 = vsub.s32 3, %v457
      %v459 = vrot.slane %v442, %v458
      %v496 = vunpack.c.l.b16 %v410
      %v497 = vunpack.c.h.b16 %v410
      %v498 = vunpack.c.l.b16 %v411
      %v499 = vunpack.c.h.b16 %v411
      %v500 = vunpack.c.l.b16 %v412
      %v501 = vunpack.c.h.b16 %v412
      %v502 = vunpack.c.l.b16 %v413
      %v503 = vunpack.c.h.b16 %v413
      %v504 = vunpack.c.l.b16 %v414
      %v505 = vunpack.c.h.b16 %v414
      %v506 = vunpack.c.l.b16 %v415
      %v507 = vunpack.c.h.b16 %v415
      %v508 = vunpack.c.l.b16 %v416
      %v509 = vunpack.c.h.b16 %v416
      %v510 = vunpack.c.l.b16 %v417
      %v511 = vunpack.c.h.b16 %v417
      %v512 = vunpack.c.l.b16 %v418
      %v513 = vunpack.c.h.b16 %v418
      %v514 = vunpack.c.l.b16 %v419
      %v515 = vunpack.c.h.b16 %v419
      %v516 = vunpack.c.l.b16 %v420
      %v517 = vunpack.c.h.b16 %v420
      %v518 = vunpack.c.l.b16 %v421
      %v519 = vunpack.c.h.b16 %v421
      %v520 = vunpack.c.l.b16 %v422
      %v521 = vunpack.c.h.b16 %v422
      %v522 = vunpack.c.l.b16 %v423
      %v523 = vunpack.c.h.b16 %v423
      %v524 = vunpack.c.l.b16 %v424
      %v525 = vunpack.c.h.b16 %v424
      %v526 = vunpack.c.l.b16 %v425
      %v527 = vunpack.c.h.b16 %v425
      %v528 = vunpack.c.l.b16 %v426
      %v529 = vunpack.c.h.b16 %v426
      %v530 = vunpack.c.l.b16 %v427
      %v531 = vunpack.c.h.b16 %v427
      %v532 = vunpack.c.l.b16 %v428
      %v533 = vunpack.c.h.b16 %v428
      %v534 = vunpack.c.l.b16 %v429
      %v535 = vunpack.c.h.b16 %v429
      %v536 = vunpack.c.l.b16 %v430
      %v537 = vunpack.c.h.b16 %v430
      %v538 = vunpack.c.l.b16 %v431
      %v539 = vunpack.c.h.b16 %v431
      %v540 = vunpack.c.l.b16 %v432
      %v541 = vunpack.c.h.b16 %v432
      %v542 = vunpack.c.l.b16 %v433
      %v543 = vunpack.c.h.b16 %v433
      %v544 = vunpack.c.l.b16 %v434
      %v545 = vunpack.c.h.b16 %v434
      %v546 = vunpack.c.l.b16 %v435
      %v547 = vunpack.c.h.b16 %v435
      %v548 = vunpack.c.l.b16 %v436
      %v549 = vunpack.c.h.b16 %v436
      %v550 = vunpack.c.l.b16 %v437
      %v551 = vunpack.c.h.b16 %v437
      %v552 = vunpack.c.l.b16 %v438
      %v553 = vunpack.c.h.b16 %v438
      %v554 = vunpack.c.l.b16 %v439
      %v555 = vunpack.c.h.b16 %v439
      %v556 = vunpack.c.l.b16 %v440
      %v557 = vunpack.c.h.b16 %v440
      %v558 = vunpack.c.l.b16 %v441
      %v559 = vunpack.c.h.b16 %v441
      %v560 = vpack.c.b16 %v500, %v496
      %v561 = vpack.c.b16 %v501, %v497
      %v562 = vpack.c.b16 %v502, %v498
      %v563 = vpack.c.b16 %v503, %v499
      %v564 = vpack.c.b16 %v508, %v504
      %v565 = vpack.c.b16 %v509, %v505
      %v566 = vpack.c.b16 %v510, %v506
      %v567 = vpack.c.b16 %v511, %v507
      %v568 = vpack.c.b16 %v516, %v512
      %v569 = vpack.c.b16 %v517, %v513
      %v570 = vpack.c.b16 %v518, %v514
      %v571 = vpack.c.b16 %v519, %v515
      %v572 = vpack.c.b16 %v524, %v520
      %v573 = vpack.c.b16 %v525, %v521
      %v574 = vpack.c.b16 %v526, %v522
      %v575 = vpack.c.b16 %v527, %v523
      %v576 = vpack.c.b16 %v532, %v528
      %v577 = vpack.c.b16 %v533, %v529
      %v578 = vpack.c.b16 %v534, %v530
      %v579 = vpack.c.b16 %v535, %v531
      %v580 = vpack.c.b16 %v540, %v536
      %v581 = vpack.c.b16 %v541, %v537
      %v582 = vpack.c.b16 %v542, %v538
      %v583 = vpack.c.b16 %v543, %v539
      %v584 = vpack.c.b16 %v548, %v544
      %v585 = vpack.c.b16 %v549, %v545
      %v586 = vpack.c.b16 %v550, %v546
      %v587 = vpack.c.b16 %v551, %v547
      %v588 = vpack.c.b16 %v556, %v552
      %v589 = vpack.c.b16 %v557, %v553
      %v590 = vpack.c.b16 %v558, %v554
      %v591 = vpack.c.b16 %v559, %v555
      %624 = vmatprep.subr.bf16.mxu0 %v589
      %625 = vmatpush1.bf16.msra.mxu0 %v588
      %626 = vmatprep.subr.bf16.mxu0 %v585
      %627 = vmatpush1.bf16.msra.mxu0 %v584
      %628 = vmatprep.subr.bf16.mxu0 %v581
      %629 = vmatpush1.bf16.msra.mxu0 %v580
      %630 = vmatprep.subr.bf16.mxu0 %v577
      %631 = vmatpush1.bf16.msra.mxu0 %v576
      %632 = vmatprep.subr.bf16.mxu0 %v573
      %633 = vmatpush1.bf16.msra.mxu0 %v572
      %634 = vmatprep.subr.bf16.mxu0 %v569
      %635 = vmatpush1.bf16.msra.mxu0 %v568
      %636 = vmatprep.subr.bf16.mxu0 %v565
      %637 = vmatpush1.bf16.msra.mxu0 %v564
      %638 = vmatprep.subr.bf16.mxu0 %v561
      %639 = vmatpush1.bf16.msra.mxu0 %v560
      %640 = vmatprep.subr.bf16.mxu0 0
      %641 = vmatpush2.bf16.msra.mxu0 0
      %642 = vmatprep.subr.bf16.mxu0 0
      %643 = vmatpush2.bf16.msra.mxu0 0
      %644 = vmatprep.subr.bf16.mxu0 0
      %645 = vmatpush2.bf16.msra.mxu0 0
      %646 = vmatprep.subr.bf16.mxu0 0
      %647 = vmatpush2.bf16.msra.mxu0 0
      %648 = vmatprep.subr.bf16.mxu0 0
      %649 = vmatpush2.bf16.msra.mxu0 0
      %650 = vmatprep.subr.bf16.mxu0 0
      %651 = vmatpush2.bf16.msra.mxu0 0
      %652 = vmatprep.subr.bf16.mxu0 0
      %653 = vmatpush2.bf16.msra.mxu0 0
      %654 = vmatprep.subr.bf16.mxu0 0
      %655 = vmatpush2.bf16.msra.mxu0 0
      %656 = vmatprep.mubr.bf16.mxu0 0
      %657 = vmatmul.mubr.bf16.gmra.mxu0 %v409
      %v658 = vpop.f32.mrf.mxu0
      %v659 = vadd.f32 %v447, %v658
      %v660 = vpop.f32.mrf.mxu0
      %v661 = vadd.f32 %v451, %v660
      %v662 = vpop.f32.mrf.mxu0
      %v663 = vpop.f32.mrf.mxu0
      %664 = vdwg.mxu0
      %665 = vmatprep.subr.bf16.mxu0 %v591
      %666 = vmatpush1.bf16.msra.mxu0 %v590
      %667 = vmatprep.subr.bf16.mxu0 %v587
      %668 = vmatpush1.bf16.msra.mxu0 %v586
      %669 = vmatprep.subr.bf16.mxu0 %v583
      %670 = vmatpush1.bf16.msra.mxu0 %v582
      %671 = vmatprep.subr.bf16.mxu0 %v579
      %672 = vmatpush1.bf16.msra.mxu0 %v578
      %673 = vmatprep.subr.bf16.mxu0 %v575
      %674 = vmatpush1.bf16.msra.mxu0 %v574
      %675 = vmatprep.subr.bf16.mxu0 %v571
      %676 = vmatpush1.bf16.msra.mxu0 %v570
      %677 = vmatprep.subr.bf16.mxu0 %v567
      %678 = vmatpush1.bf16.msra.mxu0 %v566
      %679 = vmatprep.subr.bf16.mxu0 %v563
      %680 = vmatpush1.bf16.msra.mxu0 %v562
      %681 = vmatprep.subr.bf16.mxu0 0
      %682 = vmatpush2.bf16.msra.mxu0 0
      %683 = vmatprep.subr.bf16.mxu0 0
      %684 = vmatpush2.bf16.msra.mxu0 0
      %685 = vmatprep.subr.bf16.mxu0 0
      %686 = vmatpush2.bf16.msra.mxu0 0
      %687 = vmatprep.subr.bf16.mxu0 0
      %688 = vmatpush2.bf16.msra.mxu0 0
      %689 = vmatprep.subr.bf16.mxu0 0
      %690 = vmatpush2.bf16.msra.mxu0 0
      %691 = vmatprep.subr.bf16.mxu0 0
      %692 = vmatpush2.bf16.msra.mxu0 0
      %693 = vmatprep.subr.bf16.mxu0 0
      %694 = vmatpush2.bf16.msra.mxu0 0
      %695 = vmatprep.subr.bf16.mxu0 0
      %696 = vmatpush2.bf16.msra.mxu0 0
      %697 = vmatprep.mubr.bf16.mxu0 0
      %698 = vmatmul.mubr.bf16.gmra.mxu0 %v409
      %v699 = vpop.f32.mrf.mxu0
      %v700 = vadd.f32 %v455, %v699
      %v701 = vpop.f32.mrf.mxu0
      %v702 = vadd.f32 %v459, %v701
      %v703 = vpop.f32.mrf.mxu0
      %v704 = vpop.f32.mrf.mxu0
      %705 = vdwg.mxu0
      %v706 = vmax.f32 %v659, 0.0
      %v707 = vmax.f32 %v661, 0.0
      %v708 = vmax.f32 %v700, 0.0
      %v709 = vmax.f32 %v702, 0.0
      %v710 = vpack.c.bf16 %v706, %v706
      %v711 = vpack.c.bf16 %v707, %v707
      %v712 = vpack.c.bf16 %v708, %v708
      %v713 = vpack.c.bf16 %v709, %v709
      %v714 = vld [vmem:[#allocation3] sm:$0xf]
      %v715 = vld [vmem:[#allocation3 + $0x4] sm:$0xf]
      %v716 = vld [vmem:[#allocation3 + $0x8] sm:$0xf]
      %v717 = vld [vmem:[#allocation3 + $0xc] sm:$0xf]
      %v718 = vld [vmem:[#allocation3 + $0x10] sm:$0xf]
      %v719 = vld [vmem:[#allocation3 + $0x14] sm:$0xf]
      %v720 = vld [vmem:[#allocation3 + $0x18] sm:$0xf]
      %v721 = vld [vmem:[#allocation3 + $0x1c] sm:$0xf]
      %v722 = vld [vmem:[#allocation3 + $0x20] sm:$0xf]
      %v723 = vld [vmem:[#allocation3 + $0x24] sm:$0xf]
      %v724 = vld [vmem:[#allocation3 + $0x28] sm:$0xf]
      %v725 = vld [vmem:[#allocation3 + $0x2c] sm:$0xf]
      %v726 = vld [vmem:[#allocation3 + $0x30] sm:$0xf]
      %v727 = vld [vmem:[#allocation3 + $0x34] sm:$0xf]
      %v728 = vld [vmem:[#allocation3 + $0x38] sm:$0xf]
      %v729 = vld [vmem:[#allocation3 + $0x3c] sm:$0xf]
      %v730 = vld [vmem:[#allocation3 + $0x40] sm:$0xf]
      %v731 = vld [vmem:[#allocation3 + $0x44] sm:$0xf]
      %v732 = vld [vmem:[#allocation3 + $0x48] sm:$0xf]
      %v733 = vld [vmem:[#allocation3 + $0x4c] sm:$0xf]
      %v734 = vld [vmem:[#allocation3 + $0x50] sm:$0xf]
      %v735 = vld [vmem:[#allocation3 + $0x54] sm:$0xf]
      %v736 = vld [vmem:[#allocation3 + $0x58] sm:$0xf]
      %v737 = vld [vmem:[#allocation3 + $0x5c] sm:$0xf]
      %v738 = vld [vmem:[#allocation3 + $0x60] sm:$0xf]
      %v739 = vld [vmem:[#allocation3 + $0x64] sm:$0xf]
      %v740 = vld [vmem:[#allocation3 + $0x68] sm:$0xf]
      %v741 = vld [vmem:[#allocation3 + $0x6c] sm:$0xf]
      %v742 = vld [vmem:[#allocation3 + $0x70] sm:$0xf]
      %v743 = vld [vmem:[#allocation3 + $0x74] sm:$0xf]
      %v744 = vld [vmem:[#allocation3 + $0x78] sm:$0xf]
      %v745 = vld [vmem:[#allocation3 + $0x7c] sm:$0xf]
      %v746 = vld [vmem:[#allocation3 + $0x80] sm:$0xf]
      %v747 = vld [vmem:[#allocation3 + $0x84] sm:$0xf]
      %v748 = vld [vmem:[#allocation3 + $0x88] sm:$0xf]
      %v749 = vld [vmem:[#allocation3 + $0x8c] sm:$0xf]
      %v750 = vld [vmem:[#allocation3 + $0x90] sm:$0xf]
      %v751 = vld [vmem:[#allocation3 + $0x94] sm:$0xf]
      %v752 = vld [vmem:[#allocation3 + $0x98] sm:$0xf]
      %v753 = vld [vmem:[#allocation3 + $0x9c] sm:$0xf]
      %v754 = vld [vmem:[#allocation3 + $0xa0] sm:$0xf]
      %v755 = vld [vmem:[#allocation3 + $0xa4] sm:$0xf]
      %v756 = vld [vmem:[#allocation3 + $0xa8] sm:$0xf]
      %v757 = vld [vmem:[#allocation3 + $0xac] sm:$0xf]
      %v758 = vld [vmem:[#allocation3 + $0xb0] sm:$0xf]
      %v759 = vld [vmem:[#allocation3 + $0xb4] sm:$0xf]
      %v760 = vld [vmem:[#allocation3 + $0xb8] sm:$0xf]
      %v761 = vld [vmem:[#allocation3 + $0xbc] sm:$0xf]
      %v762 = vld [vmem:[#allocation3 + $0xc0] sm:$0xf]
      %v763 = vld [vmem:[#allocation3 + $0xc4] sm:$0xf]
      %v764 = vld [vmem:[#allocation3 + $0xc8] sm:$0xf]
      %v765 = vld [vmem:[#allocation3 + $0xcc] sm:$0xf]
      %v766 = vld [vmem:[#allocation3 + $0xd0] sm:$0xf]
      %v767 = vld [vmem:[#allocation3 + $0xd4] sm:$0xf]
      %v768 = vld [vmem:[#allocation3 + $0xd8] sm:$0xf]
      %v769 = vld [vmem:[#allocation3 + $0xdc] sm:$0xf]
      %v770 = vld [vmem:[#allocation3 + $0xe0] sm:$0xf]
      %v771 = vld [vmem:[#allocation3 + $0xe4] sm:$0xf]
      %v772 = vld [vmem:[#allocation3 + $0xe8] sm:$0xf]
      %v773 = vld [vmem:[#allocation3 + $0xec] sm:$0xf]
      %v774 = vld [vmem:[#allocation3 + $0xf0] sm:$0xf]
      %v775 = vld [vmem:[#allocation3 + $0xf4] sm:$0xf]
      %v776 = vld [vmem:[#allocation3 + $0xf8] sm:$0xf]
      %v777 = vld [vmem:[#allocation3 + $0xfc] sm:$0xf]
      %v778 = vld [vmem:[%s4] sm:$0x1]
      %v780 = vlaneseq
      %v781 = vshrl.u32 %v780, 7
      %v782 = vsub.s32 0, %v781
      %v783 = vrot.slane %v778, %v782
      %v849 = vunpack.c.l.b16 %v714
      %v850 = vunpack.c.l.b16 %v715
      %v851 = vunpack.c.l.b16 %v716
      %v852 = vunpack.c.l.b16 %v717
      %v853 = vunpack.c.l.b16 %v718
      %v854 = vunpack.c.l.b16 %v719
      %v855 = vunpack.c.l.b16 %v720
      %v856 = vunpack.c.l.b16 %v721
      %v857 = vunpack.c.l.b16 %v722
      %v858 = vunpack.c.l.b16 %v723
      %v859 = vunpack.c.l.b16 %v724
      %v860 = vunpack.c.l.b16 %v725
      %v861 = vunpack.c.l.b16 %v726
      %v862 = vunpack.c.l.b16 %v727
      %v863 = vunpack.c.l.b16 %v728
      %v864 = vunpack.c.l.b16 %v729
      %v865 = vunpack.c.l.b16 %v730
      %v866 = vunpack.c.l.b16 %v731
      %v867 = vunpack.c.l.b16 %v732
      %v868 = vunpack.c.l.b16 %v733
      %v869 = vunpack.c.l.b16 %v734
      %v870 = vunpack.c.l.b16 %v735
      %v871 = vunpack.c.l.b16 %v736
      %v872 = vunpack.c.l.b16 %v737
      %v873 = vunpack.c.l.b16 %v738
      %v874 = vunpack.c.l.b16 %v739
      %v875 = vunpack.c.l.b16 %v740
      %v876 = vunpack.c.l.b16 %v741
      %v877 = vunpack.c.l.b16 %v742
      %v878 = vunpack.c.l.b16 %v743
      %v879 = vunpack.c.l.b16 %v744
      %v880 = vunpack.c.l.b16 %v745
      %v881 = vunpack.c.l.b16 %v746
      %v882 = vunpack.c.l.b16 %v747
      %v883 = vunpack.c.l.b16 %v748
      %v884 = vunpack.c.l.b16 %v749
      %v885 = vunpack.c.l.b16 %v750
      %v886 = vunpack.c.l.b16 %v751
      %v887 = vunpack.c.l.b16 %v752
      %v888 = vunpack.c.l.b16 %v753
      %v889 = vunpack.c.l.b16 %v754
      %v890 = vunpack.c.l.b16 %v755
      %v891 = vunpack.c.l.b16 %v756
      %v892 = vunpack.c.l.b16 %v757
      %v893 = vunpack.c.l.b16 %v758
      %v894 = vunpack.c.l.b16 %v759
      %v895 = vunpack.c.l.b16 %v760
      %v896 = vunpack.c.l.b16 %v761
      %v897 = vunpack.c.l.b16 %v762
      %v898 = vunpack.c.l.b16 %v763
      %v899 = vunpack.c.l.b16 %v764
      %v900 = vunpack.c.l.b16 %v765
      %v901 = vunpack.c.l.b16 %v766
      %v902 = vunpack.c.l.b16 %v767
      %v903 = vunpack.c.l.b16 %v768
      %v904 = vunpack.c.l.b16 %v769
      %v905 = vunpack.c.l.b16 %v770
      %v906 = vunpack.c.l.b16 %v771
      %v907 = vunpack.c.l.b16 %v772
      %v908 = vunpack.c.l.b16 %v773
      %v909 = vunpack.c.l.b16 %v774
      %v910 = vunpack.c.l.b16 %v775
      %v911 = vunpack.c.l.b16 %v776
      %v912 = vunpack.c.l.b16 %v777
      %v913 = vpack.c.b16 %v850, %v849
      %v914 = vpack.c.b16 %v852, %v851
      %v915 = vpack.c.b16 %v854, %v853
      %v916 = vpack.c.b16 %v856, %v855
      %v917 = vpack.c.b16 %v858, %v857
      %v918 = vpack.c.b16 %v860, %v859
      %v919 = vpack.c.b16 %v862, %v861
      %v920 = vpack.c.b16 %v864, %v863
      %v921 = vpack.c.b16 %v866, %v865
      %v922 = vpack.c.b16 %v868, %v867
      %v923 = vpack.c.b16 %v870, %v869
      %v924 = vpack.c.b16 %v872, %v871
      %v925 = vpack.c.b16 %v874, %v873
      %v926 = vpack.c.b16 %v876, %v875
      %v927 = vpack.c.b16 %v878, %v877
      %v928 = vpack.c.b16 %v880, %v879
      %v929 = vpack.c.b16 %v882, %v881
      %v930 = vpack.c.b16 %v884, %v883
      %v931 = vpack.c.b16 %v886, %v885
      %v932 = vpack.c.b16 %v888, %v887
      %v933 = vpack.c.b16 %v890, %v889
      %v934 = vpack.c.b16 %v892, %v891
      %v935 = vpack.c.b16 %v894, %v893
      %v936 = vpack.c.b16 %v896, %v895
      %v937 = vpack.c.b16 %v898, %v897
      %v938 = vpack.c.b16 %v900, %v899
      %v939 = vpack.c.b16 %v902, %v901
      %v940 = vpack.c.b16 %v904, %v903
      %v941 = vpack.c.b16 %v906, %v905
      %v942 = vpack.c.b16 %v908, %v907
      %v943 = vpack.c.b16 %v910, %v909
      %v944 = vpack.c.b16 %v912, %v911
      %977 = vmatprep.subr.bf16.mxu0 0
      %978 = vmatpush1.bf16.msra.mxu0 %v920
      %979 = vmatprep.subr.bf16.mxu0 0
      %980 = vmatpush1.bf16.msra.mxu0 %v919
      %981 = vmatprep.subr.bf16.mxu0 0
      %982 = vmatpush1.bf16.msra.mxu0 %v918
      %983 = vmatprep.subr.bf16.mxu0 0
      %984 = vmatpush1.bf16.msra.mxu0 %v917
      %985 = vmatprep.subr.bf16.mxu0 0
      %986 = vmatpush1.bf16.msra.mxu0 %v916
      %987 = vmatprep.subr.bf16.mxu0 0
      %988 = vmatpush1.bf16.msra.mxu0 %v915
      %989 = vmatprep.subr.bf16.mxu0 0
      %990 = vmatpush1.bf16.msra.mxu0 %v914
      %991 = vmatprep.subr.bf16.mxu0 0
      %992 = vmatpush1.bf16.msra.mxu0 %v913
      %993 = vmatprep.subr.bf16.mxu0 0
      %994 = vmatpush2.bf16.msra.mxu0 %v928
      %995 = vmatprep.subr.bf16.mxu0 0
      %996 = vmatpush2.bf16.msra.mxu0 %v927
      %997 = vmatprep.subr.bf16.mxu0 0
      %998 = vmatpush2.bf16.msra.mxu0 %v926
      %999 = vmatprep.subr.bf16.mxu0 0
      %1000 = vmatpush2.bf16.msra.mxu0 %v925
      %1001 = vmatprep.subr.bf16.mxu0 0
      %1002 = vmatpush2.bf16.msra.mxu0 %v924
      %1003 = vmatprep.subr.bf16.mxu0 0
      %1004 = vmatpush2.bf16.msra.mxu0 %v923
      %1005 = vmatprep.subr.bf16.mxu0 0
      %1006 = vmatpush2.bf16.msra.mxu0 %v922
      %1007 = vmatprep.subr.bf16.mxu0 0
      %1008 = vmatpush2.bf16.msra.mxu0 %v921
      %1009 = vmatprep.mubr.bf16.mxu0 %v711
      %1010 = vmatmul.mubr.bf16.gmra.mxu0 %v710
      %v1011 = vpop.f32.mrf.mxu0
      %v1012 = vadd.f32 %v783, %v1011
      %v1013 = vpop.f32.mrf.mxu0
      %v1014 = vpop.f32.mrf.mxu0
      %v1015 = vpop.f32.mrf.mxu0
      %1016 = vdwg.mxu0
      %1017 = vmatprep.subr.bf16.mxu0 0
      %1018 = vmatpush1.bf16.msra.mxu0 %v936
      %1019 = vmatprep.subr.bf16.mxu0 0
      %1020 = vmatpush1.bf16.msra.mxu0 %v935
      %1021 = vmatprep.subr.bf16.mxu0 0
      %1022 = vmatpush1.bf16.msra.mxu0 %v934
      %1023 = vmatprep.subr.bf16.mxu0 0
      %1024 = vmatpush1.bf16.msra.mxu0 %v933
      %1025 = vmatprep.subr.bf16.mxu0 0
      %1026 = vmatpush1.bf16.msra.mxu0 %v932
      %1027 = vmatprep.subr.bf16.mxu0 0
      %1028 = vmatpush1.bf16.msra.mxu0 %v931
      %1029 = vmatprep.subr.bf16.mxu0 0
      %1030 = vmatpush1.bf16.msra.mxu0 %v930
      %1031 = vmatprep.subr.bf16.mxu0 0
      %1032 = vmatpush1.bf16.msra.mxu0 %v929
      %1033 = vmatprep.subr.bf16.mxu0 0
      %1034 = vmatpush2.bf16.msra.mxu0 %v944
      %1035 = vmatprep.subr.bf16.mxu0 0
      %1036 = vmatpush2.bf16.msra.mxu0 %v943
      %1037 = vmatprep.subr.bf16.mxu0 0
      %1038 = vmatpush2.bf16.msra.mxu0 %v942
      %1039 = vmatprep.subr.bf16.mxu0 0
      %1040 = vmatpush2.bf16.msra.mxu0 %v941
      %1041 = vmatprep.subr.bf16.mxu0 0
      %1042 = vmatpush2.bf16.msra.mxu0 %v940
      %1043 = vmatprep.subr.bf16.mxu0 0
      %1044 = vmatpush2.bf16.msra.mxu0 %v939
      %1045 = vmatprep.subr.bf16.mxu0 0
      %1046 = vmatpush2.bf16.msra.mxu0 %v938
      %1047 = vmatprep.subr.bf16.mxu0 0
      %1048 = vmatpush2.bf16.msra.mxu0 %v937
      %1049 = vmatprep.mubr.bf16.mxu0 %v713
      %1050 = vmatmul.mubr.bf16.gmra.mxu0 %v712
      %v1051 = vpop.f32.mrf.mxu0
      %v1052 = vadd.f32 %v1012, %v1051
      %v1053 = vpop.f32.mrf.mxu0
      %v1054 = vpop.f32.mrf.mxu0
      %v1055 = vpop.f32.mrf.mxu0
      %1056 = vdwg.mxu0
      %v1057 = vpack.c.bf16 %v1052, %v1052
      %v1058 = vld [vmem:[%s5] sm:$0xf]
      %v1059 = vld [vmem:[%s5 + $0x4] sm:$0xf]
      %v1060 = vld [vmem:[%s5 + $0x8] sm:$0xf]
      %v1061 = vld [vmem:[%s5 + $0xc] sm:$0xf]
      %v1062 = vld [vmem:[%s5 + $0x10] sm:$0xf]
      %v1063 = vld [vmem:[%s5 + $0x14] sm:$0xf]
      %v1064 = vld [vmem:[%s5 + $0x18] sm:$0xf]
      %v1065 = vld [vmem:[%s5 + $0x1c] sm:$0xf]
      %v1066 = vld [vmem:[%s5 + $0x20] sm:$0xf]
      %v1067 = vld [vmem:[%s5 + $0x24] sm:$0xf]
      %v1068 = vld [vmem:[%s5 + $0x28] sm:$0xf]
      %v1069 = vld [vmem:[%s5 + $0x2c] sm:$0xf]
      %v1070 = vld [vmem:[%s5 + $0x30] sm:$0xf]
      %v1071 = vld [vmem:[%s5 + $0x34] sm:$0xf]
      %v1072 = vld [vmem:[%s5 + $0x38] sm:$0xf]
      %v1073 = vld [vmem:[%s5 + $0x3c] sm:$0xf]
      %v1074 = vld [vmem:[%s6] sm:$0x1]
      %v1076 = vlaneseq
      %v1077 = vshrl.u32 %v1076, 7
      %v1078 = vsub.s32 0, %v1077
      %v1079 = vrot.slane %v1074, %v1078
      %v1097 = vunpack.c.l.b16 %v1058
      %v1098 = vunpack.c.l.b16 %v1059
      %v1099 = vunpack.c.l.b16 %v1060
      %v1100 = vunpack.c.l.b16 %v1061
      %v1101 = vunpack.c.l.b16 %v1062
      %v1102 = vunpack.c.l.b16 %v1063
      %v1103 = vunpack.c.l.b16 %v1064
      %v1104 = vunpack.c.l.b16 %v1065
      %v1105 = vunpack.c.l.b16 %v1066
      %v1106 = vunpack.c.l.b16 %v1067
      %v1107 = vunpack.c.l.b16 %v1068
      %v1108 = vunpack.c.l.b16 %v1069
      %v1109 = vunpack.c.l.b16 %v1070
      %v1110 = vunpack.c.l.b16 %v1071
      %v1111 = vunpack.c.l.b16 %v1072
      %v1112 = vunpack.c.l.b16 %v1073
      %v1113 = vpack.c.b16 %v1098, %v1097
      %v1114 = vpack.c.b16 %v1100, %v1099
      %v1115 = vpack.c.b16 %v1102, %v1101
      %v1116 = vpack.c.b16 %v1104, %v1103
      %v1117 = vpack.c.b16 %v1106, %v1105
      %v1118 = vpack.c.b16 %v1108, %v1107
      %v1119 = vpack.c.b16 %v1110, %v1109
      %v1120 = vpack.c.b16 %v1112, %v1111
      %1129 = vmatprep.subr.bf16.mxu0 0
      %1130 = vmatpush1.bf16.msra.mxu0 %v1120
      %1131 = vmatprep.subr.bf16.mxu0 0
      %1132 = vmatpush1.bf16.msra.mxu0 %v1119
      %1133 = vmatprep.subr.bf16.mxu0 0
      %1134 = vmatpush1.bf16.msra.mxu0 %v1118
      %1135 = vmatprep.subr.bf16.mxu0 0
      %1136 = vmatpush1.bf16.msra.mxu0 %v1117
      %1137 = vmatprep.subr.bf16.mxu0 0
      %1138 = vmatpush1.bf16.msra.mxu0 %v1116
      %1139 = vmatprep.subr.bf16.mxu0 0
      %1140 = vmatpush1.bf16.msra.mxu0 %v1115
      %1141 = vmatprep.subr.bf16.mxu0 0
      %1142 = vmatpush1.bf16.msra.mxu0 %v1114
      %1143 = vmatprep.subr.bf16.mxu0 0
      %1144 = vmatpush1.bf16.msra.mxu0 %v1113
      %1145 = vmatprep.subr.bf16.mxu0 0
      %1146 = vmatpush2.bf16.msra.mxu0 0
      %1147 = vmatprep.subr.bf16.mxu0 0
      %1148 = vmatpush2.bf16.msra.mxu0 0
      %1149 = vmatprep.subr.bf16.mxu0 0
      %1150 = vmatpush2.bf16.msra.mxu0 0
      %1151 = vmatprep.subr.bf16.mxu0 0
      %1152 = vmatpush2.bf16.msra.mxu0 0
      %1153 = vmatprep.subr.bf16.mxu0 0
      %1154 = vmatpush2.bf16.msra.mxu0 0
      %1155 = vmatprep.subr.bf16.mxu0 0
      %1156 = vmatpush2.bf16.msra.mxu0 0
      %1157 = vmatprep.subr.bf16.mxu0 0
      %1158 = vmatpush2.bf16.msra.mxu0 0
      %1159 = vmatprep.subr.bf16.mxu0 0
      %1160 = vmatpush2.bf16.msra.mxu0 0
      %1161 = vmatprep.mubr.bf16.mxu0 0
      %1162 = vmatmul.mubr.bf16.gmra.mxu0 %v1057
      %v1163 = vpop.f32.mrf.mxu0
      %v1164 = vadd.f32 %v1079, %v1163
      %v1165 = vpop.f32.mrf.mxu0
      %v1166 = vpop.f32.mrf.mxu0
      %v1167 = vpop.f32.mrf.mxu0
      %1168 = vdwg.mxu0
      %1169 = vst [vmem:[#allocation6] sm:$0x3] %v1052
      %1170 = vst [vmem:[#allocation6 + $0x2] sm:$0x3] %v1164
    $region41: #{tpu_custom_call.1} parent=1 // pred_fallthru
      _
    // Predicated region
    $region42: #{tpu_custom_call.1} parent=1 // pred_check
      _
    $region43: #{tpu_custom_call.1} parent=1 // pred_check_branch
      %1172 = sbr.rel (0) target = $region45
    $region44: #{tpu_custom_call.1} parent=1 // pred_region
      %s1174 = ssub.s32 64, 64
      %1175 = vsyncadd [#allocation5], %s1174
      %s1177 = sshll.u32 [#allocation6], 4
      %s1178 = int_to_ptr.vmem [resolvable:$true] %s1177
      %1180 = dma.vmem_to_hbm [thread:$0]  %s1178, 64, %s7, [#allocation5]
    $region45: #{tpu_custom_call.1} parent=1 // pred_fallthru
      _
    // Predicated region
    $region46: #{tpu_custom_call.1} parent=1 // pred_check
      _
    $region47: #{tpu_custom_call.1} parent=1 // pred_check_branch
      %1182 = sbr.rel (0) target = $region49
    $region48: #{tpu_custom_call.1} parent=1 // pred_region
      %1183 = dma.done [#allocation5], 64
    $region49: #{tpu_custom_call.1} parent=1 // pred_fallthru
      _
    %1184 = vsyncpa [#allocation4], 1
    %1185 = vsyncpa [#allocation5], 1

</llo_original>
